<compile_context>
chip_gen: v7x
topology: tpu7x:2x2x1
jax: 0.10.0
libtpu: 0.0.40
codegen_flags: <defaults>
</compile_context>

<pallas_src>
import numpy as np
import jax
import jax.numpy as jnp
from jax.experimental import pallas as pl
from jax.experimental.pallas import tpu as pltpu


# ------------------------- transform matrices (host glue) ---------------------
def _dct_mats(N):
    # DCT-II (torch_dct, norm=None) along last dim:  y = x @ R
    # exact inverse:                                  x = y @ S
    n = np.arange(N, dtype=np.float64)
    k = np.arange(N, dtype=np.float64)
    R = 2.0 * np.cos(np.pi * (2.0 * n[:, None] + 1.0) * k[None, :] / (2.0 * N))
    S = np.cos(np.pi * (2.0 * n[None, :] + 1.0) * k[:, None] / (2.0 * N)) / N
    S[0, :] = 1.0 / (2.0 * N)
    return R, S


def _rfft_mats(W):
    # rfft along last dim:  X = x @ (Fr + i*Fi),  shapes (W, W//2+1)
    Wr = W // 2 + 1
    n = np.arange(W, dtype=np.float64)[:, None]
    f = np.arange(Wr, dtype=np.float64)[None, :]
    ang = 2.0 * np.pi * n * f / W
    return np.cos(ang), -np.sin(ang)


def _irfft_mats(W):
    # irfft(X, n=W) along last dim:  x = Xr @ Gr + Xi @ Gi,  shapes (W//2+1, W)
    Wr = W // 2 + 1
    f = np.arange(Wr, dtype=np.float64)[:, None]
    n = np.arange(W, dtype=np.float64)[None, :]
    ang = 2.0 * np.pi * n * f / W
    coef = np.where((f == 0) | (2 * f == W), 1.0, 2.0)
    Gr = coef * np.cos(ang) / W
    Gi = -coef * np.sin(ang) / W
    return Gr, Gi


# --------------------------------- kernel -------------------------------------
def ccl_kernel(x_ref, wfr_ref, wfi_ref, tfr_ref, tfi_ref, tir_ref, tii_ref,
               bias_ref, out_ref):
    # x_ref   : (1, Cin, H*W)       one batch element (matmul dtype)
    # wfr/wfi : (Cin, Cout, H*Wr)   f32 spectral weights (DCT_H + rFFT_W, flattened)
    # tfr/tfi : (H*W, H*Wr)         fused forward transform  kron(DCT_H, rFFT_W)
    # tir/tii : (H*Wr, Hs*Ws)       fused inverse transform  kron(iDCT_H[::s0], irFFT_W[:, ::s1])
    # bias    : (Cout, 1)           f32
    # out_ref : (1, Cout, Hs*Ws)    f32
    x = x_ref[0]                                                        # (Cin, HW)

    # forward spectral transform for all input channels at once (2 MXU matmuls)
    xr = jnp.dot(x, tfr_ref[...], preferred_element_type=jnp.float32)  # (Cin, HWr)
    xi = jnp.dot(x, tfi_ref[...], preferred_element_type=jnp.float32)  # (Cin, HWr)

    # complex pointwise product + reduction over Cin, all Cout at once (f32, lane-dense)
    wfr = wfr_ref[...]                                                  # (Cin, Cout, HWr)
    wfi = wfi_ref[...]
    xr_b = xr[:, None, :]
    xi_b = xi[:, None, :]
    hr = (xr_b * wfr - xi_b * wfi).sum(axis=0)                          # (Cout, HWr)
    hi = (xr_b * wfi + xi_b * wfr).sum(axis=0)                          # (Cout, HWr)

    # fused inverse transform (output stride already folded in) + bias, single store
    out = (jnp.dot(hr.astype(tir_ref.dtype), tir_ref[...],
                   preferred_element_type=jnp.float32)
           + jnp.dot(hi.astype(tii_ref.dtype), tii_ref[...],
                     preferred_element_type=jnp.float32)
           + bias_ref[...])                                             # (Cout, HsWs)
    out_ref[0] = out


# -------------------------------- wrapper --------------------------------------
def ccl_forward(x, weight, bias, stride, use_bf16_matmul=True):
    B, c_in, H, W = x.shape
    c_out, _, kh, kw = weight.shape
    s0, s1 = int(stride[0]), int(stride[1])
    Wr = W // 2 + 1
    Hs = -(-H // s0)          # rows kept by [::s0]
    Ws = -(-W // s1)          # cols kept by [::s1]

    mm_dtype = jnp.bfloat16 if use_bf16_matmul else jnp.float32

    # ---- exact transform matrices built in float64, then cast ----
    R, S = _dct_mats(H)
    Fr, Fi = _rfft_mats(W)
    Gr, Gi = _irfft_mats(W)
    St_s = S.T[::s0, :]                         # iDCT_H as left-matmul, rows subsampled
    Gr_s, Gi_s = Gr[:, ::s1], Gi[:, ::s1]       # irFFT_W, columns subsampled

    # fused forward transform:  xr_flat = x_flat @ Tf_r   (Tf[(k,l),(i,j)] = R[k,i]*F[l,j])
    Tf_r = np.einsum('ki,lj->klij', R, Fr).reshape(H * W, H * Wr)
    Tf_i = np.einsum('ki,lj->klij', R, Fi).reshape(H * W, H * Wr)
    # fused inverse transform (stride folded):  out_flat = hr @ Ti_r + hi @ Ti_i
    #   Ti[(i,j),(a,b)] = St_s[a,i] * G_s[j,b]
    Ti_r = np.einsum('ai,jb->ijab', St_s, Gr_s).reshape(H * Wr, Hs * Ws)
    Ti_i = np.einsum('ai,jb->ijab', St_s, Gi_s).reshape(H * Wr, Hs * Ws)

    Tf_r = jnp.asarray(Tf_r, mm_dtype)
    Tf_i = jnp.asarray(Tf_i, mm_dtype)
    Ti_r = jnp.asarray(Ti_r, mm_dtype)
    Ti_i = jnp.asarray(Ti_i, mm_dtype)

    # ---- weight spectral pre-processing (glue, f32): zero-pad kh->H, DCT_H, rFFT_W ----
    Rj = jnp.asarray(R, jnp.float32)
    Frj = jnp.asarray(Fr, jnp.float32)
    Fij = jnp.asarray(Fi, jnp.float32)
    wd = jnp.einsum('oihw,hk->oikw', weight, Rj[:kh])                   # (Cout,Cin,H,kw)
    wfr = jnp.einsum('oikw,wf->iokf', wd, Frj[:kw]).reshape(c_in, c_out, H * Wr)
    wfi = jnp.einsum('oikw,wf->iokf', wd, Fij[:kw]).reshape(c_in, c_out, H * Wr)

    x_flat = x.reshape(B, c_in, H * W).astype(mm_dtype)
    bias2d = bias.reshape(c_out, 1).astype(jnp.float32)

    # NOTE: at larger Cout/Cin/H, tile wfr/wfi over an extra Cout grid axis instead of
    # keeping the full spectral weights resident (v7x has only 64 MiB VMEM).
    out = pl.pallas_call(
        ccl_kernel,
        out_shape=jax.ShapeDtypeStruct((B, c_out, Hs * Ws), jnp.float32),
        grid=(B,),
        in_specs=[
            pl.BlockSpec((1, c_in, H * W), lambda b: (b, 0, 0)),
            pl.BlockSpec((c_in, c_out, H * Wr), lambda b: (0, 0, 0)),
            pl.BlockSpec((c_in, c_out, H * Wr), lambda b: (0, 0, 0)),
            pl.BlockSpec((H * W, H * Wr), lambda b: (0, 0)),
            pl.BlockSpec((H * W, H * Wr), lambda b: (0, 0)),
            pl.BlockSpec((H * Wr, Hs * Ws), lambda b: (0, 0)),
            pl.BlockSpec((H * Wr, Hs * Ws), lambda b: (0, 0)),
            pl.BlockSpec((c_out, 1), lambda b: (0, 0)),
        ],
        out_specs=pl.BlockSpec((1, c_out, Hs * Ws), lambda b: (b, 0, 0)),
        compiler_params=pltpu.CompilerParams(dimension_semantics=("parallel",)),
    )(x_flat, wfr, wfi, Tf_r, Tf_i, Ti_r, Ti_i, bias2d)

    return out.reshape(B, c_out, Hs, Ws)


# ----------------------------- pure-JAX reference -------------------------------
def ref_forward(x, weight, bias, stride):
    B, c_in, H, W = x.shape
    c_out, _, kh, kw = weight.shape
    R, S = _dct_mats(H)
    Rj = jnp.asarray(R, jnp.float32)
    Sj = jnp.asarray(S, jnp.float32)
    xd = jnp.einsum('bchw,hk->bckw', x, Rj)                 # DCT along H
    xf = jnp.fft.rfft(xd, axis=-1)[:, None]                 # (B,1,Cin,H,Wr)
    wd = jnp.einsum('oihw,hk->oikw', weight, Rj[:kh])       # pad + DCT along H
    wf = jnp.fft.rfft(wd, n=W, axis=-1)                     # (Cout,Cin,H,Wr)
    hf = (xf * wf).sum(2)                                   # (B,Cout,H,Wr)
    h = jnp.fft.irfft(hf, n=W, axis=-1)                     # (B,Cout,H,W)
    h = jnp.einsum('bokw,kn->bonw', h, Sj) + bias[None, :, None, None]
    return h[:, :, ::stride[0], ::stride[1]]


# ---------------------------------- main ----------------------------------------
if __name__ == "__main__":
    B, c_in, c_out = 2, 4, 4
    H = W = 16
    kh = kw = 3
    stride = (2, 2)

    key = jax.random.PRNGKey(0)
    kx, kwgt, kb = jax.random.split(key, 3)
    # deterministic init matching the module: uniform in [-K, K], K = sqrt(1/(c_in*kh*kw))
    K = float(1.0 / np.sqrt(c_in * kh * kw))
    weight = jax.random.uniform(kwgt, (c_out, c_in, kh, kw), jnp.float32, -K, K)
    bias = jax.random.uniform(kb, (c_out,), jnp.float32, -K, K)
    x = jax.random.normal(kx, (B, c_in, H, W), dtype=jnp.float32)

    out = jax.block_until_ready(ccl_forward(x, weight, bias, stride))
    ref = jax.block_until_ready(ref_forward(x, weight, bias, stride))

    np.testing.assert_allclose(np.asarray(out), np.asarray(ref), rtol=2e-2, atol=2e-1)
    assert out.shape == (B, c_out, H // stride[0], W // stride[1])
    print("KERNEL_OK")
</pallas_src>

<mosaic_0001>
module attributes {stable_mosaic.version = 11 : i64} {
  func.func @ccl_kernel(%arg0: i32, %arg1: memref<1x4x256xbf16, #tpu.memory_space<vmem>>, %arg2: memref<4x4x144xf32, #tpu.memory_space<vmem>>, %arg3: memref<4x4x144xf32, #tpu.memory_space<vmem>>, %arg4: memref<256x144xbf16, #tpu.memory_space<vmem>>, %arg5: memref<256x144xbf16, #tpu.memory_space<vmem>>, %arg6: memref<144x64xbf16, #tpu.memory_space<vmem>>, %arg7: memref<144x64xbf16, #tpu.memory_space<vmem>>, %arg8: memref<4x1xf32, #tpu.memory_space<vmem>>, %arg9: memref<1x4x64xf32, #tpu.memory_space<vmem>>) attributes {dimension_semantics = [#tpu.dimension_semantics<parallel>], iteration_bounds = array<i64: 2>, scalar_prefetch = 0 : i64, scratch_operands = 0 : i64, tpu.core_type = #tpu.core_type<tc>, window_params = [{transform_indices = @transform_0, window_bounds = array<i64: 1, 4, 256>}, {pipeline_mode = #tpu.pipeline_mode<synchronous>, transform_indices = @transform_1, window_bounds = array<i64: 4, 4, 144>}, {pipeline_mode = #tpu.pipeline_mode<synchronous>, transform_indices = @transform_2, window_bounds = array<i64: 4, 4, 144>}, {pipeline_mode = #tpu.pipeline_mode<synchronous>, transform_indices = @transform_3, window_bounds = array<i64: 256, 144>}, {pipeline_mode = #tpu.pipeline_mode<synchronous>, transform_indices = @transform_4, window_bounds = array<i64: 256, 144>}, {pipeline_mode = #tpu.pipeline_mode<synchronous>, transform_indices = @transform_5, window_bounds = array<i64: 144, 64>}, {pipeline_mode = #tpu.pipeline_mode<synchronous>, transform_indices = @transform_6, window_bounds = array<i64: 144, 64>}, {pipeline_mode = #tpu.pipeline_mode<synchronous>, transform_indices = @transform_7, window_bounds = array<i64: 4, 1>}, {transform_indices = @transform_8, window_bounds = array<i64: 1, 4, 64>}]} {
    %c0 = arith.constant 0 : index
    %c0_0 = arith.constant 0 : index
    %c0_1 = arith.constant 0 : index
    %0 = vector.load %arg1[%c0, %c0_0, %c0_1] : memref<1x4x256xbf16, #tpu.memory_space<vmem>>, vector<1x4x256xbf16>
    %1 = vector.shape_cast %0 : vector<1x4x256xbf16> to vector<4x256xbf16>
    %c0_2 = arith.constant 0 : index
    %c0_3 = arith.constant 0 : index
    %2 = vector.load %arg4[%c0_2, %c0_3] : memref<256x144xbf16, #tpu.memory_space<vmem>>, vector<256x144xbf16>
    %cst = arith.constant dense<0.000000e+00> : vector<4x144xf32>
    %3 = tpu.matmul %1, %2, %cst {dimension_numbers = #tpu.dot_dimension_numbers<[1], [0], [0], [1], [0, 0, 1, 1], [], []>} : vector<4x256xbf16>, vector<256x144xbf16>, vector<4x144xf32> -> vector<4x144xf32>
    %c0_4 = arith.constant 0 : index
    %c0_5 = arith.constant 0 : index
    %4 = vector.load %arg5[%c0_4, %c0_5] : memref<256x144xbf16, #tpu.memory_space<vmem>>, vector<256x144xbf16>
    %cst_6 = arith.constant dense<0.000000e+00> : vector<4x144xf32>
    %5 = tpu.matmul %1, %4, %cst_6 {dimension_numbers = #tpu.dot_dimension_numbers<[1], [0], [0], [1], [0, 0, 1, 1], [], []>} : vector<4x256xbf16>, vector<256x144xbf16>, vector<4x144xf32> -> vector<4x144xf32>
    %c0_7 = arith.constant 0 : index
    %c0_8 = arith.constant 0 : index
    %c0_9 = arith.constant 0 : index
    %6 = vector.load %arg2[%c0_7, %c0_8, %c0_9] : memref<4x4x144xf32, #tpu.memory_space<vmem>>, vector<4x4x144xf32>
    %c0_10 = arith.constant 0 : index
    %c0_11 = arith.constant 0 : index
    %c0_12 = arith.constant 0 : index
    %7 = vector.load %arg3[%c0_10, %c0_11, %c0_12] : memref<4x4x144xf32, #tpu.memory_space<vmem>>, vector<4x4x144xf32>
    %8 = vector.shape_cast %3 : vector<4x144xf32> to vector<4x1x144xf32>
    %9 = vector.shape_cast %5 : vector<4x144xf32> to vector<4x1x144xf32>
    %10 = vector.broadcast %8 : vector<4x1x144xf32> to vector<4x4x144xf32>
    %11 = arith.mulf %10, %6 : vector<4x4x144xf32>
    %12 = vector.broadcast %9 : vector<4x1x144xf32> to vector<4x4x144xf32>
    %13 = arith.mulf %12, %7 : vector<4x4x144xf32>
    %14 = arith.subf %11, %13 : vector<4x4x144xf32>
    %cst_13 = arith.constant dense<0.000000e+00> : vector<4x144xf32>
    %15 = vector.multi_reduction <add>, %14, %cst_13 [0] : vector<4x4x144xf32> to vector<4x144xf32>
    %16 = vector.broadcast %8 : vector<4x1x144xf32> to vector<4x4x144xf32>
    %17 = arith.mulf %16, %7 : vector<4x4x144xf32>
    %18 = vector.broadcast %9 : vector<4x1x144xf32> to vector<4x4x144xf32>
    %19 = arith.mulf %18, %6 : vector<4x4x144xf32>
    %20 = arith.addf %17, %19 : vector<4x4x144xf32>
    %cst_14 = arith.constant dense<0.000000e+00> : vector<4x144xf32>
    %21 = vector.multi_reduction <add>, %20, %cst_14 [0] : vector<4x4x144xf32> to vector<4x144xf32>
    %22 = arith.truncf %15 : vector<4x144xf32> to vector<4x144xbf16>
    %c0_15 = arith.constant 0 : index
    %c0_16 = arith.constant 0 : index
    %23 = vector.load %arg6[%c0_15, %c0_16] : memref<144x64xbf16, #tpu.memory_space<vmem>>, vector<144x64xbf16>
    %cst_17 = arith.constant dense<0.000000e+00> : vector<4x64xf32>
    %24 = tpu.matmul %22, %23, %cst_17 {dimension_numbers = #tpu.dot_dimension_numbers<[1], [0], [0], [1], [0, 0, 1, 1], [], []>} : vector<4x144xbf16>, vector<144x64xbf16>, vector<4x64xf32> -> vector<4x64xf32>
    %25 = arith.truncf %21 : vector<4x144xf32> to vector<4x144xbf16>
    %c0_18 = arith.constant 0 : index
    %c0_19 = arith.constant 0 : index
    %26 = vector.load %arg7[%c0_18, %c0_19] : memref<144x64xbf16, #tpu.memory_space<vmem>>, vector<144x64xbf16>
    %cst_20 = arith.constant dense<0.000000e+00> : vector<4x64xf32>
    %27 = tpu.matmul %25, %26, %cst_20 {dimension_numbers = #tpu.dot_dimension_numbers<[1], [0], [0], [1], [0, 0, 1, 1], [], []>} : vector<4x144xbf16>, vector<144x64xbf16>, vector<4x64xf32> -> vector<4x64xf32>
    %28 = arith.addf %24, %27 : vector<4x64xf32>
    %c0_21 = arith.constant 0 : index
    %c0_22 = arith.constant 0 : index
    %29 = vector.load %arg8[%c0_21, %c0_22] : memref<4x1xf32, #tpu.memory_space<vmem>>, vector<4x1xf32>
    %30 = vector.broadcast %29 : vector<4x1xf32> to vector<4x64xf32>
    %31 = arith.addf %28, %30 : vector<4x64xf32>
    %c0_23 = arith.constant 0 : index
    %c0_24 = arith.constant 0 : index
    %c0_25 = arith.constant 0 : index
    %32 = vector.load %arg9[%c0_23, %c0_24, %c0_25] : memref<1x4x64xf32, #tpu.memory_space<vmem>>, vector<1x4x64xf32>
    %33 = vector.shape_cast %32 : vector<1x4x64xf32> to vector<4x64xf32>
    %34 = vector.shape_cast %31 : vector<4x64xf32> to vector<1x4x64xf32>
    tpu.vector_store %arg9[%c0_23, %c0_24, %c0_25], %34 {strides = array<i32>} : memref<1x4x64xf32, #tpu.memory_space<vmem>>, vector<1x4x64xf32>,
    return
  }
  func.func @transform_0(%arg0: i32) -> (i32, i32, i32) {
    %c0_i32 = arith.constant 0 : i32
    %c0_i32_0 = arith.constant 0 : i32
    %c0_i32_1 = arith.constant 0 : i32
    return %arg0, %c0_i32, %c0_i32_0 : i32, i32, i32
  }
  func.func @transform_1(%arg0: i32) -> (i32, i32, i32) {
    %c0_i32 = arith.constant 0 : i32
    %c0_i32_0 = arith.constant 0 : i32
    %c0_i32_1 = arith.constant 0 : i32
    %c0_i32_2 = arith.constant 0 : i32
    return %c0_i32, %c0_i32_0, %c0_i32_1 : i32, i32, i32
  }
  func.func @transform_2(%arg0: i32) -> (i32, i32, i32) {
    %c0_i32 = arith.constant 0 : i32
    %c0_i32_0 = arith.constant 0 : i32
    %c0_i32_1 = arith.constant 0 : i32
    %c0_i32_2 = arith.constant 0 : i32
    return %c0_i32, %c0_i32_0, %c0_i32_1 : i32, i32, i32
  }
  func.func @transform_3(%arg0: i32) -> (i32, i32) {
    %c0_i32 = arith.constant 0 : i32
    %c0_i32_0 = arith.constant 0 : i32
    %c0_i32_1 = arith.constant 0 : i32
    return %c0_i32, %c0_i32_0 : i32, i32
  }
  func.func @transform_4(%arg0: i32) -> (i32, i32) {
    %c0_i32 = arith.constant 0 : i32
    %c0_i32_0 = arith.constant 0 : i32
    %c0_i32_1 = arith.constant 0 : i32
    return %c0_i32, %c0_i32_0 : i32, i32
  }
  func.func @transform_5(%arg0: i32) -> (i32, i32) {
    %c0_i32 = arith.constant 0 : i32
    %c0_i32_0 = arith.constant 0 : i32
    %c0_i32_1 = arith.constant 0 : i32
    return %c0_i32, %c0_i32_0 : i32, i32
  }
  func.func @transform_6(%arg0: i32) -> (i32, i32) {
    %c0_i32 = arith.constant 0 : i32
    %c0_i32_0 = arith.constant 0 : i32
    %c0_i32_1 = arith.constant 0 : i32
    return %c0_i32, %c0_i32_0 : i32, i32
  }
  func.func @transform_7(%arg0: i32) -> (i32, i32) {
    %c0_i32 = arith.constant 0 : i32
    %c0_i32_0 = arith.constant 0 : i32
    %c0_i32_1 = arith.constant 0 : i32
    return %c0_i32, %c0_i32_0 : i32, i32
  }
  func.func @transform_8(%arg0: i32) -> (i32, i32, i32) {
    %c0_i32 = arith.constant 0 : i32
    %c0_i32_0 = arith.constant 0 : i32
    %c0_i32_1 = arith.constant 0 : i32
    return %arg0, %c0_i32, %c0_i32_0 : i32, i32, i32
  }
}

</mosaic_0001>

<llo_original>
// kernel: tpu_custom_call.1
$region0: #{tpu_custom_call.1}
  #allocation0 [shape = 'u32[]', space=smem, size = 0x4, offset = 0x4, fixed_abs, tag = 'smem constant byte address 0x4 - core index']
  #allocation1 [shape = 'u32[144,128]{1,0:T(1,128)}', space=vmem, size = 0x12000, scoped, tag = 'internal scratch']
  %s0 = inlined_call_operand.vmem [shape: bf16[2,4,256], index: 0, kind: input, shape index: {}]
  %s1 = inlined_call_operand.vmem [shape: f32[4,4,144], index: 1, kind: input, shape index: {}]
  %s2 = inlined_call_operand.vmem [shape: f32[4,4,144], index: 2, kind: input, shape index: {}]
  %s3 = inlined_call_operand.vmem [shape: bf16[256,144], index: 3, kind: input, shape index: {}]
  %s4 = inlined_call_operand.vmem [shape: bf16[256,144], index: 4, kind: input, shape index: {}]
  %s5 = inlined_call_operand.vmem [shape: bf16[144,64], index: 5, kind: input, shape index: {}]
  %s6 = inlined_call_operand.vmem [shape: bf16[144,64], index: 6, kind: input, shape index: {}]
  %s7 = inlined_call_operand.vmem [shape: f32[4,1], index: 7, kind: input, shape index: {}]
  %s8 = inlined_call_operand.hbm [shape: f32[2,4,64], index: 8, kind: output, shape index: {}]
  %s9 = sld [smem:[#allocation0]]
  $region65: #{tpu_custom_call.1} parent=0
    _
  %s11 = ssub.s32 1, %s9
  %s12 = scalar_select 0, %s11, %s9
  $region1: #{tpu_custom_call.1} parent=0
    #allocation2 [shape = 'u8[4096]{0}', space=vmem, size = 0x1000, scoped, tag = 'output window, operand 0']
    #allocation3 [shape = 's32[2]{0}', space=sflag, size = 0x8, scoped, tag = 'scoped memory for tpu_custom_call.1']
    %13 = vsyncpa [#allocation3], 0
    %s14 = scalar_lea.sflag [#allocation3], 1
    %15 = vsyncpa %s14, 0
    loop: start=0, step=1, limit=4
    $region2: #{tpu_custom_call.1} parent=1 // loop_pre_header
      _
    $region3: #{tpu_custom_call.1} parent=1 // loop_header
      %s17 = sphi 0, %s21
      %p18 = scmp.ge.s32.totalorder %s17, 4
      %s27 = sphi 0, %s29
      %s30 = sphi 0, %s27
      %s31 = sphi 0, %s30
      %s47 = sphi 0, %s31
      %s51 = sphi 0, %s51
      %s53 = sphi 0, %s51
      %s54 = sphi 0, %s53
      %s68 = sphi 0, %s54
      %s72 = sphi 0, %s72
      %s74 = sphi 0, %s72
      %s75 = sphi 0, %s74
      %s89 = sphi 0, %s75
      %s93 = sphi 0, %s93
      %s95 = sphi 0, %s93
      %s96 = sphi 0, %s95
      %s110 = sphi 0, %s96
      %s114 = sphi 0, %s114
      %s116 = sphi 0, %s114
      %s117 = sphi 0, %s116
      %s131 = sphi 0, %s117
      %s135 = sphi 0, %s135
      %s137 = sphi 0, %s135
      %s138 = sphi 0, %s137
      %s152 = sphi 0, %s138
      %s156 = sphi 0, %s156
      %s158 = sphi 0, %s156
      %s159 = sphi 0, %s158
      %s173 = sphi 0, %s159
      %s177 = sphi 0, %s177
      %s179 = sphi 0, %s177
      %s180 = sphi 0, %s179
      %s194 = sphi 0, %s180
      %s200 = sphi 0, %s202
      %s203 = sphi 0, %s200
      %s204 = sphi 0, %s203
      %s220 = sphi 0, %s204
    $region4: #{tpu_custom_call.1} parent=1 // loop_header_branch
      %20 = sbr.rel (%p18) target = $region8
    $region5: #{tpu_custom_call.1} parent=1 // loop_body
      %s22 = ssub.s32 %s17, 1
      %s23 = ssub.s32 %s17, 2
      %s24 = sadd.s32 %s17, 1
      %s25 = ssub.s32 %s17, %s24
      %p26 = scmp.eq.s32.totalorder %s25, 0
      %s28 = sadd.s32 %s27, 1
      %s29 = scalar_select %p26, %s27, %s28
      %p32 = pneg %p26
      %p33 = scmp.eq.s32.totalorder %s17, 1
      %p34 = por %p32, %p33
      %p35 = scmp.ne.s32.totalorder %s27, %s30
      %p36 = scmp.eq.s32.totalorder %s17, 0
      %p37 = por %p35, %p36
      %p38 = scmp.ne.s32.totalorder %s27, %s30
      %p39 = scmp.eq.s32.totalorder %s22, 1
      %p40 = por %p38, %p39
      %p41 = scmp.ne.s32.totalorder %s30, %s31
      %p42 = scmp.eq.s32.totalorder %s22, 0
      %p43 = por %p41, %p42
      %p44 = scmp.ne.s32.totalorder %s30, %s31
      %p45 = scmp.eq.s32.totalorder %s23, 1
      %p46 = por %p44, %p45
      %p48 = scmp.ne.s32.totalorder %s31, %s47
      %p49 = scmp.eq.s32.totalorder %s23, 0
      %p50 = por %p48, %p49
      %s52 = sadd.s32 %s51, 1
      %p55 = scmp.eq.s32.totalorder %s17, 1
      %p56 = scmp.ne.s32.totalorder %s51, %s53
      %p57 = scmp.eq.s32.totalorder %s17, 0
      %p58 = por %p56, %p57
      %p59 = scmp.ne.s32.totalorder %s51, %s53
      %p60 = scmp.eq.s32.totalorder %s22, 1
      %p61 = por %p59, %p60
      %p62 = scmp.ne.s32.totalorder %s53, %s54
      %p63 = scmp.eq.s32.totalorder %s22, 0
      %p64 = por %p62, %p63
      %p65 = scmp.ne.s32.totalorder %s53, %s54
      %p66 = scmp.eq.s32.totalorder %s23, 1
      %p67 = por %p65, %p66
      %p69 = scmp.ne.s32.totalorder %s54, %s68
      %p70 = scmp.eq.s32.totalorder %s23, 0
      %p71 = por %p69, %p70
      %s73 = sadd.s32 %s72, 1
      %p76 = scmp.eq.s32.totalorder %s17, 1
      %p77 = scmp.ne.s32.totalorder %s72, %s74
      %p78 = scmp.eq.s32.totalorder %s17, 0
      %p79 = por %p77, %p78
      %p80 = scmp.ne.s32.totalorder %s72, %s74
      %p81 = scmp.eq.s32.totalorder %s22, 1
      %p82 = por %p80, %p81
      %p83 = scmp.ne.s32.totalorder %s74, %s75
      %p84 = scmp.eq.s32.totalorder %s22, 0
      %p85 = por %p83, %p84
      %p86 = scmp.ne.s32.totalorder %s74, %s75
      %p87 = scmp.eq.s32.totalorder %s23, 1
      %p88 = por %p86, %p87
      %p90 = scmp.ne.s32.totalorder %s75, %s89
      %p91 = scmp.eq.s32.totalorder %s23, 0
      %p92 = por %p90, %p91
      %s94 = sadd.s32 %s93, 1
      %p97 = scmp.eq.s32.totalorder %s17, 1
      %p98 = scmp.ne.s32.totalorder %s93, %s95
      %p99 = scmp.eq.s32.totalorder %s17, 0
      %p100 = por %p98, %p99
      %p101 = scmp.ne.s32.totalorder %s93, %s95
      %p102 = scmp.eq.s32.totalorder %s22, 1
      %p103 = por %p101, %p102
      %p104 = scmp.ne.s32.totalorder %s95, %s96
      %p105 = scmp.eq.s32.totalorder %s22, 0
      %p106 = por %p104, %p105
      %p107 = scmp.ne.s32.totalorder %s95, %s96
      %p108 = scmp.eq.s32.totalorder %s23, 1
      %p109 = por %p107, %p108
      %p111 = scmp.ne.s32.totalorder %s96, %s110
      %p112 = scmp.eq.s32.totalorder %s23, 0
      %p113 = por %p111, %p112
      %s115 = sadd.s32 %s114, 1
      %p118 = scmp.eq.s32.totalorder %s17, 1
      %p119 = scmp.ne.s32.totalorder %s114, %s116
      %p120 = scmp.eq.s32.totalorder %s17, 0
      %p121 = por %p119, %p120
      %p122 = scmp.ne.s32.totalorder %s114, %s116
      %p123 = scmp.eq.s32.totalorder %s22, 1
      %p124 = por %p122, %p123
      %p125 = scmp.ne.s32.totalorder %s116, %s117
      %p126 = scmp.eq.s32.totalorder %s22, 0
      %p127 = por %p125, %p126
      %p128 = scmp.ne.s32.totalorder %s116, %s117
      %p129 = scmp.eq.s32.totalorder %s23, 1
      %p130 = por %p128, %p129
      %p132 = scmp.ne.s32.totalorder %s117, %s131
      %p133 = scmp.eq.s32.totalorder %s23, 0
      %p134 = por %p132, %p133
      %s136 = sadd.s32 %s135, 1
      %p139 = scmp.eq.s32.totalorder %s17, 1
      %p140 = scmp.ne.s32.totalorder %s135, %s137
      %p141 = scmp.eq.s32.totalorder %s17, 0
      %p142 = por %p140, %p141
      %p143 = scmp.ne.s32.totalorder %s135, %s137
      %p144 = scmp.eq.s32.totalorder %s22, 1
      %p145 = por %p143, %p144
      %p146 = scmp.ne.s32.totalorder %s137, %s138
      %p147 = scmp.eq.s32.totalorder %s22, 0
      %p148 = por %p146, %p147
      %p149 = scmp.ne.s32.totalorder %s137, %s138
      %p150 = scmp.eq.s32.totalorder %s23, 1
      %p151 = por %p149, %p150
      %p153 = scmp.ne.s32.totalorder %s138, %s152
      %p154 = scmp.eq.s32.totalorder %s23, 0
      %p155 = por %p153, %p154
      %s157 = sadd.s32 %s156, 1
      %p160 = scmp.eq.s32.totalorder %s17, 1
      %p161 = scmp.ne.s32.totalorder %s156, %s158
      %p162 = scmp.eq.s32.totalorder %s17, 0
      %p163 = por %p161, %p162
      %p164 = scmp.ne.s32.totalorder %s156, %s158
      %p165 = scmp.eq.s32.totalorder %s22, 1
      %p166 = por %p164, %p165
      %p167 = scmp.ne.s32.totalorder %s158, %s159
      %p168 = scmp.eq.s32.totalorder %s22, 0
      %p169 = por %p167, %p168
      %p170 = scmp.ne.s32.totalorder %s158, %s159
      %p171 = scmp.eq.s32.totalorder %s23, 1
      %p172 = por %p170, %p171
      %p174 = scmp.ne.s32.totalorder %s159, %s173
      %p175 = scmp.eq.s32.totalorder %s23, 0
      %p176 = por %p174, %p175
      %s178 = sadd.s32 %s177, 1
      %p181 = scmp.eq.s32.totalorder %s17, 1
      %p182 = scmp.ne.s32.totalorder %s177, %s179
      %p183 = scmp.eq.s32.totalorder %s17, 0
      %p184 = por %p182, %p183
      %p185 = scmp.ne.s32.totalorder %s177, %s179
      %p186 = scmp.eq.s32.totalorder %s22, 1
      %p187 = por %p185, %p186
      %p188 = scmp.ne.s32.totalorder %s179, %s180
      %p189 = scmp.eq.s32.totalorder %s22, 0
      %p190 = por %p188, %p189
      %p191 = scmp.ne.s32.totalorder %s179, %s180
      %p192 = scmp.eq.s32.totalorder %s23, 1
      %p193 = por %p191, %p192
      %p195 = scmp.ne.s32.totalorder %s180, %s194
      %p196 = scmp.eq.s32.totalorder %s23, 0
      %p197 = por %p195, %p196
      %s198 = ssub.s32 %s17, %s24
      %p199 = scmp.eq.s32.totalorder %s198, 0
      %s201 = sadd.s32 %s200, 1
      %s202 = scalar_select %p199, %s200, %s201
      %p205 = pneg %p199
      %p206 = scmp.eq.s32.totalorder %s17, 1
      %p207 = por %p205, %p206
      %p208 = scmp.ne.s32.totalorder %s200, %s203
      %p209 = scmp.eq.s32.totalorder %s17, 0
      %p210 = por %p208, %p209
      %p211 = scmp.ne.s32.totalorder %s200, %s203
      %p212 = scmp.eq.s32.totalorder %s22, 1
      %p213 = por %p211, %p212
      %p214 = scmp.ne.s32.totalorder %s203, %s204
      %p215 = scmp.eq.s32.totalorder %s22, 0
      %p216 = por %p214, %p215
      %p217 = scmp.ne.s32.totalorder %s203, %s204
      %p218 = scmp.eq.s32.totalorder %s23, 1
      %p219 = por %p217, %p218
      %p221 = scmp.ne.s32.totalorder %s204, %s220
      %p222 = scmp.eq.s32.totalorder %s23, 0
      %p223 = por %p221, %p222
      %p224 = scmp.le.s32.totalorder 1, %s17
      %p225 = scmp.lt.s32.totalorder %s17, 3
      %p226 = pnand %p224, %p225
      %p227 = pneg %p226
      // Predicated region
      $region9: #{tpu_custom_call.1} parent=5 // pred_check
        _
      $region10: #{tpu_custom_call.1} parent=5 // pred_check_branch
        %229 = sbr.rel (%p226) target = $region12
      $region11: #{tpu_custom_call.1} parent=5 // pred_region
        %s230 = ssub.s32 %s17, 1
        // Predicated region
        $region13: #{tpu_custom_call.1} parent=11 // pred_check
          %p231 = pneg %p64
        $region14: #{tpu_custom_call.1} parent=11 // pred_check_branch
          %233 = sbr.rel (%p231) target = $region16
        $region15: #{tpu_custom_call.1} parent=11 // pred_region
          _
        $region16: #{tpu_custom_call.1} parent=11 // pred_fallthru
          _
        // Predicated region
        $region17: #{tpu_custom_call.1} parent=11 // pred_check
          %p234 = pneg %p85
        $region18: #{tpu_custom_call.1} parent=11 // pred_check_branch
          %236 = sbr.rel (%p234) target = $region20
        $region19: #{tpu_custom_call.1} parent=11 // pred_region
          _
        $region20: #{tpu_custom_call.1} parent=11 // pred_fallthru
          _
        // Predicated region
        $region21: #{tpu_custom_call.1} parent=11 // pred_check
          %p237 = pneg %p106
        $region22: #{tpu_custom_call.1} parent=11 // pred_check_branch
          %239 = sbr.rel (%p237) target = $region24
        $region23: #{tpu_custom_call.1} parent=11 // pred_region
          _
        $region24: #{tpu_custom_call.1} parent=11 // pred_fallthru
          _
        // Predicated region
        $region25: #{tpu_custom_call.1} parent=11 // pred_check
          %p240 = pneg %p127
        $region26: #{tpu_custom_call.1} parent=11 // pred_check_branch
          %242 = sbr.rel (%p240) target = $region28
        $region27: #{tpu_custom_call.1} parent=11 // pred_region
          _
        $region28: #{tpu_custom_call.1} parent=11 // pred_fallthru
          _
        // Predicated region
        $region29: #{tpu_custom_call.1} parent=11 // pred_check
          %p243 = pneg %p148
        $region30: #{tpu_custom_call.1} parent=11 // pred_check_branch
          %245 = sbr.rel (%p243) target = $region32
        $region31: #{tpu_custom_call.1} parent=11 // pred_region
          _
        $region32: #{tpu_custom_call.1} parent=11 // pred_fallthru
          _
        // Predicated region
        $region33: #{tpu_custom_call.1} parent=11 // pred_check
          %p246 = pneg %p169
        $region34: #{tpu_custom_call.1} parent=11 // pred_check_branch
          %248 = sbr.rel (%p246) target = $region36
        $region35: #{tpu_custom_call.1} parent=11 // pred_region
          _
        $region36: #{tpu_custom_call.1} parent=11 // pred_fallthru
          _
        // Predicated region
        $region37: #{tpu_custom_call.1} parent=11 // pred_check
          %p249 = pneg %p190
        $region38: #{tpu_custom_call.1} parent=11 // pred_check_branch
          %251 = sbr.rel (%p249) target = $region40
        $region39: #{tpu_custom_call.1} parent=11 // pred_region
          _
        $region40: #{tpu_custom_call.1} parent=11 // pred_fallthru
          _
      $region12: #{tpu_custom_call.1} parent=5 // pred_fallthru
        _
      %p252 = scmp.lt.s32.totalorder %s17, 2
      // Predicated region
      $region41: #{tpu_custom_call.1} parent=5 // pred_check
        %p253 = pneg %p252
      $region42: #{tpu_custom_call.1} parent=5 // pred_check_branch
        %255 = sbr.rel (%p253) target = $region44
      $region43: #{tpu_custom_call.1} parent=5 // pred_region
        // Predicated region
        $region45: #{tpu_custom_call.1} parent=43 // pred_check
          %p256 = pneg %p37
        $region46: #{tpu_custom_call.1} parent=43 // pred_check_branch
          %258 = sbr.rel (%p256) target = $region48
        $region47: #{tpu_custom_call.1} parent=43 // pred_region
          %p259 = scmp.lt.s32.totalorder %s17, 1
          %s260 = scalar_select %p259, %s17, 1
          %s261 = smul.addr %s260, 2
          %s262 = smul.addr %s261, 2
          %s263 = scalar_lea.vmem %s0, %s262
        $region48: #{tpu_custom_call.1} parent=43 // pred_fallthru
          _
      $region44: #{tpu_custom_call.1} parent=5 // pred_fallthru
        _
      %p264 = scmp.le.s32.totalorder 1, %s17
      %p265 = scmp.lt.s32.totalorder %s17, 3
      %p266 = pnand %p264, %p265
      %p267 = pneg %p266
      // Predicated region
      $region49: #{tpu_custom_call.1} parent=5 // pred_check
        _
      $region50: #{tpu_custom_call.1} parent=5 // pred_check_branch
        %269 = sbr.rel (%p266) target = $region52
      $region51: #{tpu_custom_call.1} parent=5 // pred_region
        %s270 = ssub.s32 %s17, 1
        %p271 = scmp.lt.s32.totalorder %s22, 1
        %s272 = scalar_select %p271, %s22, 1
        %s273 = smul.addr %s272, 2
        %s274 = smul.addr %s273, 2
        %s275 = scalar_lea.vmem %s0, %s274
        %p276 = pneg %p43
        %p277 = pneg %p40
        %p278 = pneg %p64
        %p279 = pneg %p61
        %p280 = pneg %p85
        %p281 = pneg %p82
        %p282 = pneg %p106
        %p283 = pneg %p103
        %p284 = pneg %p127
        %p285 = pneg %p124
        %p286 = pneg %p148
        %p287 = pneg %p145
        %p288 = pneg %p169
        %p289 = pneg %p166
        %p290 = pneg %p190
        %p291 = pneg %p187
        %p292 = pneg %p216
        %p293 = pneg %p213
        %s294 = sand.u32 %s203, 1
        %s295 = scalar_lea.sflag [#allocation3], %s294
        %s296 = sand.u32 %s203, 1
        %s297 = smul.addr %s296, 4
        %s298 = scalar_lea.vmem [#allocation2], %s297
        %p299 = scmp.lt.s32.totalorder %s22, 1
        %s300 = scalar_select %p299, %s22, 1
        %s301 = smul.addr %s300, 2
        %s302 = smul.addr %s301, 2
        %s303 = scalar_lea.vmem %s0, %s302
        %v305 = vld [vmem:[%s303] sm:$0xf]
        %v306 = vld [vmem:[%s3] sm:$0xff]
        %v307 = vld [vmem:[%s3 + $0x8] sm:$0xff]
        %v308 = vld [vmem:[%s3 + $0x10] sm:$0xff]
        %v309 = vld [vmem:[%s3 + $0x18] sm:$0xff]
        %v310 = vld [vmem:[%s3 + $0x20] sm:$0xff]
        %v311 = vld [vmem:[%s3 + $0x28] sm:$0xff]
        %v312 = vld [vmem:[%s3 + $0x30] sm:$0xff]
        %v313 = vld [vmem:[%s3 + $0x38] sm:$0xff]
        %v314 = vld [vmem:[%s3 + $0x40] sm:$0xff]
        %v315 = vld [vmem:[%s3 + $0x48] sm:$0xff]
        %v316 = vld [vmem:[%s3 + $0x50] sm:$0xff]
        %v317 = vld [vmem:[%s3 + $0x58] sm:$0xff]
        %v318 = vld [vmem:[%s3 + $0x60] sm:$0xff]
        %v319 = vld [vmem:[%s3 + $0x68] sm:$0xff]
        %v320 = vld [vmem:[%s3 + $0x70] sm:$0xff]
        %v321 = vld [vmem:[%s3 + $0x78] sm:$0xff]
        %v322 = vld [vmem:[%s3 + $0x80] sm:$0xff]
        %v323 = vld [vmem:[%s3 + $0x88] sm:$0xff]
        %v324 = vld [vmem:[%s3 + $0x90] sm:$0xff]
        %v325 = vld [vmem:[%s3 + $0x98] sm:$0xff]
        %v326 = vld [vmem:[%s3 + $0xa0] sm:$0xff]
        %v327 = vld [vmem:[%s3 + $0xa8] sm:$0xff]
        %v328 = vld [vmem:[%s3 + $0xb0] sm:$0xff]
        %v329 = vld [vmem:[%s3 + $0xb8] sm:$0xff]
        %v330 = vld [vmem:[%s3 + $0xc0] sm:$0xff]
        %v331 = vld [vmem:[%s3 + $0xc8] sm:$0xff]
        %v332 = vld [vmem:[%s3 + $0xd0] sm:$0xff]
        %v333 = vld [vmem:[%s3 + $0xd8] sm:$0xff]
        %v334 = vld [vmem:[%s3 + $0xe0] sm:$0xff]
        %v335 = vld [vmem:[%s3 + $0xe8] sm:$0xff]
        %v336 = vld [vmem:[%s3 + $0xf0] sm:$0xff]
        %v337 = vld [vmem:[%s3 + $0xf8] sm:$0xff]
        %v340 = vunpack.c.l.s4 1983009808
        %v341 = vunpack.c.0.s8 %v340
        %v342 = vlaneseq
        %v343 = vshrl.u32 %v342, 7
        %v344 = vsub.s32 %v341, %v343
        %v345 = vrot.slane %v305, %v344
        %v346 = vcombine.high %v345, %v345
        %v381 = vunpack.c.l.b16 %v306
        %v382 = vunpack.c.h.b16 %v306
        %v383 = vunpack.c.l.b16 %v307
        %v384 = vunpack.c.h.b16 %v307
        %v385 = vunpack.c.l.b16 %v308
        %v386 = vunpack.c.h.b16 %v308
        %v387 = vunpack.c.l.b16 %v309
        %v388 = vunpack.c.h.b16 %v309
        %v389 = vunpack.c.l.b16 %v310
        %v390 = vunpack.c.h.b16 %v310
        %v391 = vunpack.c.l.b16 %v311
        %v392 = vunpack.c.h.b16 %v311
        %v393 = vunpack.c.l.b16 %v312
        %v394 = vunpack.c.h.b16 %v312
        %v395 = vunpack.c.l.b16 %v313
        %v396 = vunpack.c.h.b16 %v313
        %v397 = vunpack.c.l.b16 %v314
        %v398 = vunpack.c.h.b16 %v314
        %v399 = vunpack.c.l.b16 %v315
        %v400 = vunpack.c.h.b16 %v315
        %v401 = vunpack.c.l.b16 %v316
        %v402 = vunpack.c.h.b16 %v316
        %v403 = vunpack.c.l.b16 %v317
        %v404 = vunpack.c.h.b16 %v317
        %v405 = vunpack.c.l.b16 %v318
        %v406 = vunpack.c.h.b16 %v318
        %v407 = vunpack.c.l.b16 %v319
        %v408 = vunpack.c.h.b16 %v319
        %v409 = vunpack.c.l.b16 %v320
        %v410 = vunpack.c.h.b16 %v320
        %v411 = vunpack.c.l.b16 %v321
        %v412 = vunpack.c.h.b16 %v321
        %v413 = vunpack.c.l.b16 %v322
        %v414 = vunpack.c.h.b16 %v322
        %v415 = vunpack.c.l.b16 %v323
        %v416 = vunpack.c.h.b16 %v323
        %v417 = vunpack.c.l.b16 %v324
        %v418 = vunpack.c.h.b16 %v324
        %v419 = vunpack.c.l.b16 %v325
        %v420 = vunpack.c.h.b16 %v325
        %v421 = vunpack.c.l.b16 %v326
        %v422 = vunpack.c.h.b16 %v326
        %v423 = vunpack.c.l.b16 %v327
        %v424 = vunpack.c.h.b16 %v327
        %v425 = vunpack.c.l.b16 %v328
        %v426 = vunpack.c.h.b16 %v328
        %v427 = vunpack.c.l.b16 %v329
        %v428 = vunpack.c.h.b16 %v329
        %v429 = vunpack.c.l.b16 %v330
        %v430 = vunpack.c.h.b16 %v330
        %v431 = vunpack.c.l.b16 %v331
        %v432 = vunpack.c.h.b16 %v331
        %v433 = vunpack.c.l.b16 %v332
        %v434 = vunpack.c.h.b16 %v332
        %v435 = vunpack.c.l.b16 %v333
        %v436 = vunpack.c.h.b16 %v333
        %v437 = vunpack.c.l.b16 %v334
        %v438 = vunpack.c.h.b16 %v334
        %v439 = vunpack.c.l.b16 %v335
        %v440 = vunpack.c.h.b16 %v335
        %v441 = vunpack.c.l.b16 %v336
        %v442 = vunpack.c.h.b16 %v336
        %v443 = vunpack.c.l.b16 %v337
        %v444 = vunpack.c.h.b16 %v337
        %v445 = vpack.c.b16 %v383, %v381
        %v446 = vpack.c.b16 %v384, %v382
        %v447 = vpack.c.b16 %v387, %v385
        %v448 = vpack.c.b16 %v388, %v386
        %v449 = vpack.c.b16 %v391, %v389
        %v450 = vpack.c.b16 %v392, %v390
        %v451 = vpack.c.b16 %v395, %v393
        %v452 = vpack.c.b16 %v396, %v394
        %v453 = vpack.c.b16 %v399, %v397
        %v454 = vpack.c.b16 %v400, %v398
        %v455 = vpack.c.b16 %v403, %v401
        %v456 = vpack.c.b16 %v404, %v402
        %v457 = vpack.c.b16 %v407, %v405
        %v458 = vpack.c.b16 %v408, %v406
        %v459 = vpack.c.b16 %v411, %v409
        %v460 = vpack.c.b16 %v412, %v410
        %v461 = vpack.c.b16 %v415, %v413
        %v462 = vpack.c.b16 %v416, %v414
        %v463 = vpack.c.b16 %v419, %v417
        %v464 = vpack.c.b16 %v420, %v418
        %v465 = vpack.c.b16 %v423, %v421
        %v466 = vpack.c.b16 %v424, %v422
        %v467 = vpack.c.b16 %v427, %v425
        %v468 = vpack.c.b16 %v428, %v426
        %v469 = vpack.c.b16 %v431, %v429
        %v470 = vpack.c.b16 %v432, %v430
        %v471 = vpack.c.b16 %v435, %v433
        %v472 = vpack.c.b16 %v436, %v434
        %v473 = vpack.c.b16 %v439, %v437
        %v474 = vpack.c.b16 %v440, %v438
        %v475 = vpack.c.b16 %v443, %v441
        %v476 = vpack.c.b16 %v444, %v442
        %509 = vmatprep.subr.bf16.mxu0 %v446
        %510 = vmatpush1.bf16.msra.mxu0 %v445
        %511 = vmatprep.subr.bf16.mxu0 %v448
        %512 = vmatpush1.bf16.msra.mxu0 %v447
        %513 = vmatprep.subr.bf16.mxu0 %v450
        %514 = vmatpush1.bf16.msra.mxu0 %v449
        %515 = vmatprep.subr.bf16.mxu0 %v452
        %516 = vmatpush1.bf16.msra.mxu0 %v451
        %517 = vmatprep.subr.bf16.mxu0 %v454
        %518 = vmatpush1.bf16.msra.mxu0 %v453
        %519 = vmatprep.subr.bf16.mxu0 %v456
        %520 = vmatpush1.bf16.msra.mxu0 %v455
        %521 = vmatprep.subr.bf16.mxu0 %v458
        %522 = vmatpush1.bf16.msra.mxu0 %v457
        %523 = vmatprep.subr.bf16.mxu0 %v460
        %524 = vmatpush1.bf16.msra.mxu0 %v459
        %525 = vmatprep.subr.bf16.mxu0 %v462
        %526 = vmatpush1.bf16.msra.mxu0 %v461
        %527 = vmatprep.subr.bf16.mxu0 %v464
        %528 = vmatpush1.bf16.msra.mxu0 %v463
        %529 = vmatprep.subr.bf16.mxu0 %v466
        %530 = vmatpush1.bf16.msra.mxu0 %v465
        %531 = vmatprep.subr.bf16.mxu0 %v468
        %532 = vmatpush1.bf16.msra.mxu0 %v467
        %533 = vmatprep.subr.bf16.mxu0 %v470
        %534 = vmatpush1.bf16.msra.mxu0 %v469
        %535 = vmatprep.subr.bf16.mxu0 %v472
        %536 = vmatpush1.bf16.msra.mxu0 %v471
        %537 = vmatprep.subr.bf16.mxu0 %v474
        %538 = vmatpush1.bf16.msra.mxu0 %v473
        %539 = vmatprep.subr.bf16.mxu0 %v476
        %540 = vmatpush1.bf16.msra.mxu0 %v475
        %541 = vmatprep.mubr.bf16.mxu0 %v346
        %542 = vmatmul.mubr.bf16.gmra.mrb[0].mxu0 %v345
        %v543 = vpop.f32.mrb[0].mxu0
        %v544 = vadd.f32 0.0, %v543
        %v545 = vpop.f32.mrb[0].mxu0
        %v546 = vadd.f32 0.0, %v545
        %v547 = vpop.f32.mrb[0].mxu0
        %v548 = vpop.f32.mrb[0].mxu0
        %549 = vdwg.mxu0
        %v550 = vld [vmem:[%s4] sm:$0xff]
        %v551 = vld [vmem:[%s4 + $0x8] sm:$0xff]
        %v552 = vld [vmem:[%s4 + $0x10] sm:$0xff]
        %v553 = vld [vmem:[%s4 + $0x18] sm:$0xff]
        %v554 = vld [vmem:[%s4 + $0x20] sm:$0xff]
        %v555 = vld [vmem:[%s4 + $0x28] sm:$0xff]
        %v556 = vld [vmem:[%s4 + $0x30] sm:$0xff]
        %v557 = vld [vmem:[%s4 + $0x38] sm:$0xff]
        %v558 = vld [vmem:[%s4 + $0x40] sm:$0xff]
        %v559 = vld [vmem:[%s4 + $0x48] sm:$0xff]
        %v560 = vld [vmem:[%s4 + $0x50] sm:$0xff]
        %v561 = vld [vmem:[%s4 + $0x58] sm:$0xff]
        %v562 = vld [vmem:[%s4 + $0x60] sm:$0xff]
        %v563 = vld [vmem:[%s4 + $0x68] sm:$0xff]
        %v564 = vld [vmem:[%s4 + $0x70] sm:$0xff]
        %v565 = vld [vmem:[%s4 + $0x78] sm:$0xff]
        %v566 = vld [vmem:[%s4 + $0x80] sm:$0xff]
        %v567 = vld [vmem:[%s4 + $0x88] sm:$0xff]
        %v568 = vld [vmem:[%s4 + $0x90] sm:$0xff]
        %v569 = vld [vmem:[%s4 + $0x98] sm:$0xff]
        %v570 = vld [vmem:[%s4 + $0xa0] sm:$0xff]
        %v571 = vld [vmem:[%s4 + $0xa8] sm:$0xff]
        %v572 = vld [vmem:[%s4 + $0xb0] sm:$0xff]
        %v573 = vld [vmem:[%s4 + $0xb8] sm:$0xff]
        %v574 = vld [vmem:[%s4 + $0xc0] sm:$0xff]
        %v575 = vld [vmem:[%s4 + $0xc8] sm:$0xff]
        %v576 = vld [vmem:[%s4 + $0xd0] sm:$0xff]
        %v577 = vld [vmem:[%s4 + $0xd8] sm:$0xff]
        %v578 = vld [vmem:[%s4 + $0xe0] sm:$0xff]
        %v579 = vld [vmem:[%s4 + $0xe8] sm:$0xff]
        %v580 = vld [vmem:[%s4 + $0xf0] sm:$0xff]
        %v581 = vld [vmem:[%s4 + $0xf8] sm:$0xff]
        %v614 = vunpack.c.l.b16 %v550
        %v615 = vunpack.c.h.b16 %v550
        %v616 = vunpack.c.l.b16 %v551
        %v617 = vunpack.c.h.b16 %v551
        %v618 = vunpack.c.l.b16 %v552
        %v619 = vunpack.c.h.b16 %v552
        %v620 = vunpack.c.l.b16 %v553
        %v621 = vunpack.c.h.b16 %v553
        %v622 = vunpack.c.l.b16 %v554
        %v623 = vunpack.c.h.b16 %v554
        %v624 = vunpack.c.l.b16 %v555
        %v625 = vunpack.c.h.b16 %v555
        %v626 = vunpack.c.l.b16 %v556
        %v627 = vunpack.c.h.b16 %v556
        %v628 = vunpack.c.l.b16 %v557
        %v629 = vunpack.c.h.b16 %v557
        %v630 = vunpack.c.l.b16 %v558
        %v631 = vunpack.c.h.b16 %v558
        %v632 = vunpack.c.l.b16 %v559
        %v633 = vunpack.c.h.b16 %v559
        %v634 = vunpack.c.l.b16 %v560
        %v635 = vunpack.c.h.b16 %v560
        %v636 = vunpack.c.l.b16 %v561
        %v637 = vunpack.c.h.b16 %v561
        %v638 = vunpack.c.l.b16 %v562
        %v639 = vunpack.c.h.b16 %v562
        %v640 = vunpack.c.l.b16 %v563
        %v641 = vunpack.c.h.b16 %v563
        %v642 = vunpack.c.l.b16 %v564
        %v643 = vunpack.c.h.b16 %v564
        %v644 = vunpack.c.l.b16 %v565
        %v645 = vunpack.c.h.b16 %v565
        %v646 = vunpack.c.l.b16 %v566
        %v647 = vunpack.c.h.b16 %v566
        %v648 = vunpack.c.l.b16 %v567
        %v649 = vunpack.c.h.b16 %v567
        %v650 = vunpack.c.l.b16 %v568
        %v651 = vunpack.c.h.b16 %v568
        %v652 = vunpack.c.l.b16 %v569
        %v653 = vunpack.c.h.b16 %v569
        %v654 = vunpack.c.l.b16 %v570
        %v655 = vunpack.c.h.b16 %v570
        %v656 = vunpack.c.l.b16 %v571
        %v657 = vunpack.c.h.b16 %v571
        %v658 = vunpack.c.l.b16 %v572
        %v659 = vunpack.c.h.b16 %v572
        %v660 = vunpack.c.l.b16 %v573
        %v661 = vunpack.c.h.b16 %v573
        %v662 = vunpack.c.l.b16 %v574
        %v663 = vunpack.c.h.b16 %v574
        %v664 = vunpack.c.l.b16 %v575
        %v665 = vunpack.c.h.b16 %v575
        %v666 = vunpack.c.l.b16 %v576
        %v667 = vunpack.c.h.b16 %v576
        %v668 = vunpack.c.l.b16 %v577
        %v669 = vunpack.c.h.b16 %v577
        %v670 = vunpack.c.l.b16 %v578
        %v671 = vunpack.c.h.b16 %v578
        %v672 = vunpack.c.l.b16 %v579
        %v673 = vunpack.c.h.b16 %v579
        %v674 = vunpack.c.l.b16 %v580
        %v675 = vunpack.c.h.b16 %v580
        %v676 = vunpack.c.l.b16 %v581
        %v677 = vunpack.c.h.b16 %v581
        %v678 = vpack.c.b16 %v616, %v614
        %v679 = vpack.c.b16 %v617, %v615
        %v680 = vpack.c.b16 %v620, %v618
        %v681 = vpack.c.b16 %v621, %v619
        %v682 = vpack.c.b16 %v624, %v622
        %v683 = vpack.c.b16 %v625, %v623
        %v684 = vpack.c.b16 %v628, %v626
        %v685 = vpack.c.b16 %v629, %v627
        %v686 = vpack.c.b16 %v632, %v630
        %v687 = vpack.c.b16 %v633, %v631
        %v688 = vpack.c.b16 %v636, %v634
        %v689 = vpack.c.b16 %v637, %v635
        %v690 = vpack.c.b16 %v640, %v638
        %v691 = vpack.c.b16 %v641, %v639
        %v692 = vpack.c.b16 %v644, %v642
        %v693 = vpack.c.b16 %v645, %v643
        %v694 = vpack.c.b16 %v648, %v646
        %v695 = vpack.c.b16 %v649, %v647
        %v696 = vpack.c.b16 %v652, %v650
        %v697 = vpack.c.b16 %v653, %v651
        %v698 = vpack.c.b16 %v656, %v654
        %v699 = vpack.c.b16 %v657, %v655
        %v700 = vpack.c.b16 %v660, %v658
        %v701 = vpack.c.b16 %v661, %v659
        %v702 = vpack.c.b16 %v664, %v662
        %v703 = vpack.c.b16 %v665, %v663
        %v704 = vpack.c.b16 %v668, %v666
        %v705 = vpack.c.b16 %v669, %v667
        %v706 = vpack.c.b16 %v672, %v670
        %v707 = vpack.c.b16 %v673, %v671
        %v708 = vpack.c.b16 %v676, %v674
        %v709 = vpack.c.b16 %v677, %v675
        %742 = vmatprep.subr.bf16.mxu0 %v679
        %743 = vmatpush1.bf16.msra.mxu0 %v678
        %744 = vmatprep.subr.bf16.mxu0 %v681
        %745 = vmatpush1.bf16.msra.mxu0 %v680
        %746 = vmatprep.subr.bf16.mxu0 %v683
        %747 = vmatpush1.bf16.msra.mxu0 %v682
        %748 = vmatprep.subr.bf16.mxu0 %v685
        %749 = vmatpush1.bf16.msra.mxu0 %v684
        %750 = vmatprep.subr.bf16.mxu0 %v687
        %751 = vmatpush1.bf16.msra.mxu0 %v686
        %752 = vmatprep.subr.bf16.mxu0 %v689
        %753 = vmatpush1.bf16.msra.mxu0 %v688
        %754 = vmatprep.subr.bf16.mxu0 %v691
        %755 = vmatpush1.bf16.msra.mxu0 %v690
        %756 = vmatprep.subr.bf16.mxu0 %v693
        %757 = vmatpush1.bf16.msra.mxu0 %v692
        %758 = vmatprep.subr.bf16.mxu0 %v695
        %759 = vmatpush1.bf16.msra.mxu0 %v694
        %760 = vmatprep.subr.bf16.mxu0 %v697
        %761 = vmatpush1.bf16.msra.mxu0 %v696
        %762 = vmatprep.subr.bf16.mxu0 %v699
        %763 = vmatpush1.bf16.msra.mxu0 %v698
        %764 = vmatprep.subr.bf16.mxu0 %v701
        %765 = vmatpush1.bf16.msra.mxu0 %v700
        %766 = vmatprep.subr.bf16.mxu0 %v703
        %767 = vmatpush1.bf16.msra.mxu0 %v702
        %768 = vmatprep.subr.bf16.mxu0 %v705
        %769 = vmatpush1.bf16.msra.mxu0 %v704
        %770 = vmatprep.subr.bf16.mxu0 %v707
        %771 = vmatpush1.bf16.msra.mxu0 %v706
        %772 = vmatprep.subr.bf16.mxu0 %v709
        %773 = vmatpush1.bf16.msra.mxu0 %v708
        %774 = vmatprep.mubr.bf16.mxu0 %v346
        %775 = vmatmul.mubr.bf16.gmra.mrb[0].mxu0 %v345
        %v776 = vpop.f32.mrb[0].mxu0
        %v777 = vadd.f32 0.0, %v776
        %v778 = vpop.f32.mrb[0].mxu0
        %v779 = vadd.f32 0.0, %v778
        %v780 = vpop.f32.mrb[0].mxu0
        %v781 = vpop.f32.mrb[0].mxu0
        %782 = vdwg.mxu0
        %v783 = vld [vmem:[%s1] sm:$0xff]
        %v784 = vld [vmem:[%s1 + $0x8] sm:$0xff]
        %v785 = vld [vmem:[%s1 + $0x10] sm:$0xff]
        %v786 = vld [vmem:[%s1 + $0x18] sm:$0xff]
        %v787 = vld [vmem:[%s2] sm:$0xff]
        %v788 = vld [vmem:[%s2 + $0x8] sm:$0xff]
        %v789 = vld [vmem:[%s2 + $0x10] sm:$0xff]
        %v790 = vld [vmem:[%s2 + $0x18] sm:$0xff]
        %v793 = vcombine.low %v544, %v546
        %v795 = vunpack.c.l.s4 1966171168
        %v796 = vunpack.c.0.s8 %v795
        %v797 = vlaneseq
        %v798 = vshrl.u32 %v797, 7
        %v799 = vsub.s32 %v796, %v798
        %v800 = vrot.slane %v793, %v799
        %v801 = vcombine.high %v800, %v800
        %v803 = vunpack.c.l.s4 1966171168
        %v804 = vunpack.c.0.s8 %v803
        %v805 = vlaneseq
        %v806 = vshrl.u32 %v805, 7
        %v807 = vsub.s32 %v804, %v806
        %v808 = vrot.slane %v800, %v807
        %v810 = vunpack.c.l.s4 1966171168
        %v811 = vunpack.c.0.s8 %v810
        %v812 = vlaneseq
        %v813 = vshrl.u32 %v812, 7
        %v814 = vsub.s32 %v811, %v813
        %v815 = vrot.slane %v801, %v814
        %v816 = vcombine.high %v808, %v808
        %v817 = vcombine.high %v815, %v815
        %v820 = vcombine.low %v777, %v779
        %v822 = vunpack.c.l.s4 1966171168
        %v823 = vunpack.c.0.s8 %v822
        %v824 = vlaneseq
        %v825 = vshrl.u32 %v824, 7
        %v826 = vsub.s32 %v823, %v825
        %v827 = vrot.slane %v820, %v826
        %v828 = vcombine.high %v827, %v827
        %v830 = vunpack.c.l.s4 1966171168
        %v831 = vunpack.c.0.s8 %v830
        %v832 = vlaneseq
        %v833 = vshrl.u32 %v832, 7
        %v834 = vsub.s32 %v831, %v833
        %v835 = vrot.slane %v827, %v834
        %v837 = vunpack.c.l.s4 1966171168
        %v838 = vunpack.c.0.s8 %v837
        %v839 = vlaneseq
        %v840 = vshrl.u32 %v839, 7
        %v841 = vsub.s32 %v838, %v840
        %v842 = vrot.slane %v828, %v841
        %v843 = vcombine.high %v835, %v835
        %v844 = vcombine.high %v842, %v842
        %v845 = vlaneseq
        %v846 = vshrl.u32 %v845, 7
        %v847 = vsub.s32 0, %v846
        %v848 = vrot.slane %v808, %v847
        %v849 = vlaneseq
        %v850 = vshrl.u32 %v849, 7
        %v851 = vsub.s32 1, %v850
        %v852 = vrot.slane %v808, %v851
        %v853 = vlaneseq
        %v854 = vshrl.u32 %v853, 7
        %v855 = vsub.s32 0, %v854
        %v856 = vrot.slane %v815, %v855
        %v857 = vlaneseq
        %v858 = vshrl.u32 %v857, 7
        %v859 = vsub.s32 1, %v858
        %v860 = vrot.slane %v815, %v859
        %v861 = vlaneseq
        %v862 = vshrl.u32 %v861, 7
        %v863 = vsub.s32 0, %v862
        %v864 = vrot.slane %v816, %v863
        %v865 = vlaneseq
        %v866 = vshrl.u32 %v865, 7
        %v867 = vsub.s32 1, %v866
        %v868 = vrot.slane %v816, %v867
        %v869 = vlaneseq
        %v870 = vshrl.u32 %v869, 7
        %v871 = vsub.s32 0, %v870
        %v872 = vrot.slane %v817, %v871
        %v873 = vlaneseq
        %v874 = vshrl.u32 %v873, 7
        %v875 = vsub.s32 1, %v874
        %v876 = vrot.slane %v817, %v875
        %v889 = vcombine.high %v783, %v783
        %v890 = vcombine.high %v784, %v784
        %v891 = vcombine.high %v785, %v785
        %v892 = vcombine.high %v786, %v786
        %v897 = vmul.f32 %v848, %v783
        %v898 = vmul.f32 %v852, %v889
        %v899 = vmul.f32 %v856, %v784
        %v900 = vmul.f32 %v860, %v890
        %v901 = vmul.f32 %v864, %v785
        %v902 = vmul.f32 %v868, %v891
        %v903 = vmul.f32 %v872, %v786
        %v904 = vmul.f32 %v876, %v892
        %v905 = vlaneseq
        %v906 = vshrl.u32 %v905, 7
        %v907 = vsub.s32 0, %v906
        %v908 = vrot.slane %v835, %v907
        %v909 = vlaneseq
        %v910 = vshrl.u32 %v909, 7
        %v911 = vsub.s32 1, %v910
        %v912 = vrot.slane %v835, %v911
        %v913 = vlaneseq
        %v914 = vshrl.u32 %v913, 7
        %v915 = vsub.s32 0, %v914
        %v916 = vrot.slane %v842, %v915
        %v917 = vlaneseq
        %v918 = vshrl.u32 %v917, 7
        %v919 = vsub.s32 1, %v918
        %v920 = vrot.slane %v842, %v919
        %v921 = vlaneseq
        %v922 = vshrl.u32 %v921, 7
        %v923 = vsub.s32 0, %v922
        %v924 = vrot.slane %v843, %v923
        %v925 = vlaneseq
        %v926 = vshrl.u32 %v925, 7
        %v927 = vsub.s32 1, %v926
        %v928 = vrot.slane %v843, %v927
        %v929 = vlaneseq
        %v930 = vshrl.u32 %v929, 7
        %v931 = vsub.s32 0, %v930
        %v932 = vrot.slane %v844, %v931
        %v933 = vlaneseq
        %v934 = vshrl.u32 %v933, 7
        %v935 = vsub.s32 1, %v934
        %v936 = vrot.slane %v844, %v935
        %v949 = vcombine.high %v787, %v787
        %v950 = vcombine.high %v788, %v788
        %v951 = vcombine.high %v789, %v789
        %v952 = vcombine.high %v790, %v790
        %v957 = vmul.f32 %v908, %v787
        %v958 = vmul.f32 %v912, %v949
        %v959 = vmul.f32 %v916, %v788
        %v960 = vmul.f32 %v920, %v950
        %v961 = vmul.f32 %v924, %v789
        %v962 = vmul.f32 %v928, %v951
        %v963 = vmul.f32 %v932, %v790
        %v964 = vmul.f32 %v936, %v952
        %v965 = vsub.f32 %v897, %v957
        %v966 = vsub.f32 %v898, %v958
        %v967 = vsub.f32 %v899, %v959
        %v968 = vsub.f32 %v900, %v960
        %v969 = vsub.f32 %v901, %v961
        %v970 = vsub.f32 %v902, %v962
        %v971 = vsub.f32 %v903, %v963
        %v972 = vsub.f32 %v904, %v964
        %vm973 = vcmask 1043456
        %v974 = vsel %vm973, %v965, 0.0
        %v975 = vsel %vm973, %v967, 0.0
        %v976 = vadd.f32 %v974, %v975
        %v977 = vsel %vm973, %v969, 0.0
        %v978 = vadd.f32 %v976, %v977
        %v979 = vsel %vm973, %v971, 0.0
        %v980 = vadd.f32 %v978, %v979
        %vm981 = vcmask 125952
        %v982 = vsel %vm981, %v966, 0.0
        %v983 = vsel %vm981, %v968, 0.0
        %v984 = vadd.f32 %v982, %v983
        %v985 = vsel %vm981, %v970, 0.0
        %v986 = vadd.f32 %v984, %v985
        %v987 = vsel %vm981, %v972, 0.0
        %v988 = vadd.f32 %v986, %v987
        %v989 = vmul.f32 %v848, %v787
        %v990 = vmul.f32 %v852, %v949
        %v991 = vmul.f32 %v856, %v788
        %v992 = vmul.f32 %v860, %v950
        %v993 = vmul.f32 %v864, %v789
        %v994 = vmul.f32 %v868, %v951
        %v995 = vmul.f32 %v872, %v790
        %v996 = vmul.f32 %v876, %v952
        %v997 = vmul.f32 %v908, %v783
        %v998 = vmul.f32 %v912, %v889
        %v999 = vmul.f32 %v916, %v784
        %v1000 = vmul.f32 %v920, %v890
        %v1001 = vmul.f32 %v924, %v785
        %v1002 = vmul.f32 %v928, %v891
        %v1003 = vmul.f32 %v932, %v786
        %v1004 = vmul.f32 %v936, %v892
        %v1005 = vadd.f32 %v989, %v997
        %v1006 = vadd.f32 %v990, %v998
        %v1007 = vadd.f32 %v991, %v999
        %v1008 = vadd.f32 %v992, %v1000
        %v1009 = vadd.f32 %v993, %v1001
        %v1010 = vadd.f32 %v994, %v1002
        %v1011 = vadd.f32 %v995, %v1003
        %v1012 = vadd.f32 %v996, %v1004
        %v1013 = vsel %vm973, %v1005, 0.0
        %v1014 = vsel %vm973, %v1007, 0.0
        %v1015 = vadd.f32 %v1013, %v1014
        %v1016 = vsel %vm973, %v1009, 0.0
        %v1017 = vadd.f32 %v1015, %v1016
        %v1018 = vsel %vm973, %v1011, 0.0
        %v1019 = vadd.f32 %v1017, %v1018
        %v1020 = vsel %vm981, %v1006, 0.0
        %v1021 = vsel %vm981, %v1008, 0.0
        %v1022 = vadd.f32 %v1020, %v1021
        %v1023 = vsel %vm981, %v1010, 0.0
        %v1024 = vadd.f32 %v1022, %v1023
        %v1025 = vsel %vm981, %v1012, 0.0
        %v1026 = vadd.f32 %v1024, %v1025
        %v1027 = vpack.c.bf16 %v980, %v980
        %v1028 = vpack.c.bf16 %v988, %v988
        %v1029 = vld [vmem:[%s5] sm:$0xf]
        %v1030 = vld [vmem:[%s5 + $0x4] sm:$0xf]
        %v1031 = vld [vmem:[%s5 + $0x8] sm:$0xf]
        %v1032 = vld [vmem:[%s5 + $0xc] sm:$0xf]
        %v1033 = vld [vmem:[%s5 + $0x10] sm:$0xf]
        %v1034 = vld [vmem:[%s5 + $0x14] sm:$0xf]
        %v1035 = vld [vmem:[%s5 + $0x18] sm:$0xf]
        %v1036 = vld [vmem:[%s5 + $0x1c] sm:$0xf]
        %v1037 = vld [vmem:[%s5 + $0x20] sm:$0xf]
        %v1038 = vld [vmem:[%s5 + $0x24] sm:$0xf]
        %v1039 = vld [vmem:[%s5 + $0x28] sm:$0xf]
        %v1040 = vld [vmem:[%s5 + $0x2c] sm:$0xf]
        %v1041 = vld [vmem:[%s5 + $0x30] sm:$0xf]
        %v1042 = vld [vmem:[%s5 + $0x34] sm:$0xf]
        %v1043 = vld [vmem:[%s5 + $0x38] sm:$0xf]
        %v1044 = vld [vmem:[%s5 + $0x3c] sm:$0xf]
        %v1045 = vld [vmem:[%s5 + $0x40] sm:$0xf]
        %v1046 = vld [vmem:[%s5 + $0x44] sm:$0xf]
        %v1047 = vpack.c.bf16 %v1019, %v1019
        %v1048 = vpack.c.bf16 %v1026, %v1026
        %v1049 = vld [vmem:[%s6] sm:$0xf]
        %v1050 = vld [vmem:[%s6 + $0x4] sm:$0xf]
        %v1051 = vld [vmem:[%s6 + $0x8] sm:$0xf]
        %v1052 = vld [vmem:[%s6 + $0xc] sm:$0xf]
        %v1053 = vld [vmem:[%s6 + $0x10] sm:$0xf]
        %v1054 = vld [vmem:[%s6 + $0x14] sm:$0xf]
        %v1055 = vld [vmem:[%s6 + $0x18] sm:$0xf]
        %v1056 = vld [vmem:[%s6 + $0x1c] sm:$0xf]
        %v1057 = vld [vmem:[%s6 + $0x20] sm:$0xf]
        %v1058 = vld [vmem:[%s6 + $0x24] sm:$0xf]
        %v1059 = vld [vmem:[%s6 + $0x28] sm:$0xf]
        %v1060 = vld [vmem:[%s6 + $0x2c] sm:$0xf]
        %v1061 = vld [vmem:[%s6 + $0x30] sm:$0xf]
        %v1062 = vld [vmem:[%s6 + $0x34] sm:$0xf]
        %v1063 = vld [vmem:[%s6 + $0x38] sm:$0xf]
        %v1064 = vld [vmem:[%s6 + $0x3c] sm:$0xf]
        %v1065 = vld [vmem:[%s6 + $0x40] sm:$0xf]
        %v1066 = vld [vmem:[%s6 + $0x44] sm:$0xf]
        %v1085 = vunpack.c.l.b16 %v1049
        %v1086 = vunpack.c.l.b16 %v1050
        %v1087 = vunpack.c.l.b16 %v1051
        %v1088 = vunpack.c.l.b16 %v1052
        %v1089 = vunpack.c.l.b16 %v1053
        %v1090 = vunpack.c.l.b16 %v1054
        %v1091 = vunpack.c.l.b16 %v1055
        %v1092 = vunpack.c.l.b16 %v1056
        %v1093 = vunpack.c.l.b16 %v1057
        %v1094 = vunpack.c.l.b16 %v1058
        %v1095 = vunpack.c.l.b16 %v1059
        %v1096 = vunpack.c.l.b16 %v1060
        %v1097 = vunpack.c.l.b16 %v1061
        %v1098 = vunpack.c.l.b16 %v1062
        %v1099 = vunpack.c.l.b16 %v1063
        %v1100 = vunpack.c.l.b16 %v1064
        %v1101 = vunpack.c.l.b16 %v1065
        %v1102 = vunpack.c.l.b16 %v1066
        %v1103 = vpack.c.b16 %v1086, %v1085
        %v1104 = vpack.c.b16 %v1088, %v1087
        %v1105 = vpack.c.b16 %v1090, %v1089
        %v1106 = vpack.c.b16 %v1092, %v1091
        %v1107 = vpack.c.b16 %v1094, %v1093
        %v1108 = vpack.c.b16 %v1096, %v1095
        %v1109 = vpack.c.b16 %v1098, %v1097
        %v1110 = vpack.c.b16 %v1100, %v1099
        %v1111 = vpack.c.b16 %v1102, %v1101
        %vm1121 = vcmask 130048
        %v1123 = vsel %vm1121, %v1048, 0
        %1125 = vmatprep.subr.bf16.mxu0 0
        %1126 = vmatpush1.bf16.msra.mxu0 %v1103
        %1127 = vmatprep.subr.bf16.mxu0 0
        %1128 = vmatpush1.bf16.msra.mxu0 %v1104
        %1129 = vmatprep.subr.bf16.mxu0 0
        %1130 = vmatpush1.bf16.msra.mxu0 %v1105
        %1131 = vmatprep.subr.bf16.mxu0 0
        %1132 = vmatpush1.bf16.msra.mxu0 %v1106
        %1133 = vmatprep.subr.bf16.mxu0 0
        %1134 = vmatpush1.bf16.msra.mxu0 %v1107
        %1135 = vmatprep.subr.bf16.mxu0 0
        %1136 = vmatpush1.bf16.msra.mxu0 %v1108
        %1137 = vmatprep.subr.bf16.mxu0 0
        %1138 = vmatpush1.bf16.msra.mxu0 %v1109
        %1139 = vmatprep.subr.bf16.mxu0 0
        %1140 = vmatpush1.bf16.msra.mxu0 %v1110
        %1141 = vmatprep.subr.bf16.mxu0 0
        %1142 = vmatpush1.bf16.msra.mxu0 %v1111
        %1143 = vmatprep.subr.bf16.mxu0 0
        %1144 = vmatpush1.bf16.msra.mxu0 0
        %1145 = vmatprep.subr.bf16.mxu0 0
        %1146 = vmatpush1.bf16.msra.mxu0 0
        %1147 = vmatprep.subr.bf16.mxu0 0
        %1148 = vmatpush1.bf16.msra.mxu0 0
        %1149 = vmatprep.subr.bf16.mxu0 0
        %1150 = vmatpush1.bf16.msra.mxu0 0
        %1151 = vmatprep.subr.bf16.mxu0 0
        %1152 = vmatpush1.bf16.msra.mxu0 0
        %1153 = vmatprep.subr.bf16.mxu0 0
        %1154 = vmatpush1.bf16.msra.mxu0 0
        %1155 = vmatprep.subr.bf16.mxu0 0
        %1156 = vmatpush1.bf16.msra.mxu0 0
        %1157 = vmatprep.mubr.bf16.mxu0 %v1123
        %1158 = vmatmul.mubr.bf16.gmra.mrb[0].mxu0 %v1047
        %v1159 = vpop.f32.mrb[0].mxu0
        %v1160 = vadd.f32 0.0, %v1159
        %v1161 = vpop.f32.mrb[0].mxu0
        %v1162 = vpop.f32.mrb[0].mxu0
        %v1163 = vpop.f32.mrb[0].mxu0
        %1164 = vdwg.mxu0
        %v1183 = vunpack.c.l.b16 %v1029
        %v1184 = vunpack.c.l.b16 %v1030
        %v1185 = vunpack.c.l.b16 %v1031
        %v1186 = vunpack.c.l.b16 %v1032
        %v1187 = vunpack.c.l.b16 %v1033
        %v1188 = vunpack.c.l.b16 %v1034
        %v1189 = vunpack.c.l.b16 %v1035
        %v1190 = vunpack.c.l.b16 %v1036
        %v1191 = vunpack.c.l.b16 %v1037
        %v1192 = vunpack.c.l.b16 %v1038
        %v1193 = vunpack.c.l.b16 %v1039
        %v1194 = vunpack.c.l.b16 %v1040
        %v1195 = vunpack.c.l.b16 %v1041
        %v1196 = vunpack.c.l.b16 %v1042
        %v1197 = vunpack.c.l.b16 %v1043
        %v1198 = vunpack.c.l.b16 %v1044
        %v1199 = vunpack.c.l.b16 %v1045
        %v1200 = vunpack.c.l.b16 %v1046
        %v1201 = vpack.c.b16 %v1184, %v1183
        %v1202 = vpack.c.b16 %v1186, %v1185
        %v1203 = vpack.c.b16 %v1188, %v1187
        %v1204 = vpack.c.b16 %v1190, %v1189
        %v1205 = vpack.c.b16 %v1192, %v1191
        %v1206 = vpack.c.b16 %v1194, %v1193
        %v1207 = vpack.c.b16 %v1196, %v1195
        %v1208 = vpack.c.b16 %v1198, %v1197
        %v1209 = vpack.c.b16 %v1200, %v1199
        %v1220 = vsel %vm1121, %v1028, 0
        %1222 = vmatprep.subr.bf16.mxu0 0
        %1223 = vmatpush1.bf16.msra.mxu0 %v1201
        %1224 = vmatprep.subr.bf16.mxu0 0
        %1225 = vmatpush1.bf16.msra.mxu0 %v1202
        %1226 = vmatprep.subr.bf16.mxu0 0
        %1227 = vmatpush1.bf16.msra.mxu0 %v1203
        %1228 = vmatprep.subr.bf16.mxu0 0
        %1229 = vmatpush1.bf16.msra.mxu0 %v1204
        %1230 = vmatprep.subr.bf16.mxu0 0
        %1231 = vmatpush1.bf16.msra.mxu0 %v1205
        %1232 = vmatprep.subr.bf16.mxu0 0
        %1233 = vmatpush1.bf16.msra.mxu0 %v1206
        %1234 = vmatprep.subr.bf16.mxu0 0
        %1235 = vmatpush1.bf16.msra.mxu0 %v1207
        %1236 = vmatprep.subr.bf16.mxu0 0
        %1237 = vmatpush1.bf16.msra.mxu0 %v1208
        %1238 = vmatprep.subr.bf16.mxu0 0
        %1239 = vmatpush1.bf16.msra.mxu0 %v1209
        %1240 = vmatprep.subr.bf16.mxu0 0
        %1241 = vmatpush1.bf16.msra.mxu0 0
        %1242 = vmatprep.subr.bf16.mxu0 0
        %1243 = vmatpush1.bf16.msra.mxu0 0
        %1244 = vmatprep.subr.bf16.mxu0 0
        %1245 = vmatpush1.bf16.msra.mxu0 0
        %1246 = vmatprep.subr.bf16.mxu0 0
        %1247 = vmatpush1.bf16.msra.mxu0 0
        %1248 = vmatprep.subr.bf16.mxu0 0
        %1249 = vmatpush1.bf16.msra.mxu0 0
        %1250 = vmatprep.subr.bf16.mxu0 0
        %1251 = vmatpush1.bf16.msra.mxu0 0
        %1252 = vmatprep.subr.bf16.mxu0 0
        %1253 = vmatpush1.bf16.msra.mxu0 0
        %1254 = vmatprep.mubr.bf16.mxu0 %v1220
        %1255 = vmatmul.mubr.bf16.gmra.mrb[0].mxu0 %v1027
        %v1256 = vpop.f32.mrb[0].mxu0
        %v1257 = vadd.f32 %v1160, %v1256
        %v1258 = vpop.f32.mrb[0].mxu0
        %v1259 = vpop.f32.mrb[0].mxu0
        %v1260 = vpop.f32.mrb[0].mxu0
        %1261 = vdwg.mxu0
        %v1262 = vld [vmem:[%s7] sm:$0xf]
        %1264 = vset.pattern.permute.xlu0 0
        %1265 = vperm.xlu0 %1264, %v1262
        %v1266 = vpop.permute.xlu0 %1265
        %v1268 = vadd.f32 %v1257, %v1266
        %vm1269 = vcmask 519168
        %1270 = vst.msk [vmem:[%s298] sm:$0xf] %vm1269, %v1268
        %s1271 = sand.u32 %s203, 1
        %s1272 = scalar_lea.sflag [#allocation3], %s1271
        %s1273 = sand.u32 %s203, 1
        %s1274 = smul.addr %s1273, 4
        %s1275 = scalar_lea.vmem [#allocation2], %s1274
        // Predicated region
        $region53: #{tpu_custom_call.1} parent=51 // pred_check
          %p1276 = pneg %p213
        $region54: #{tpu_custom_call.1} parent=51 // pred_check_branch
          %1278 = sbr.rel (%p1276) target = $region56
        $region55: #{tpu_custom_call.1} parent=51 // pred_region
          %s1280 = ssub.s32 64, 64
          %1281 = vsyncadd %s1272, %s1280
          %s1282 = smul.addr %s22, 64
          %s1283 = scalar_lea.hbm %s8, %s1282
          %s1285 = sshll.u32 %s1275, 4
          %s1286 = int_to_ptr.vmem [resolvable:$true] %s1285
          %1288 = dma.vmem_to_hbm [thread:$0]  %s1286, 64, %s1283, %s1272
        $region56: #{tpu_custom_call.1} parent=51 // pred_fallthru
          _
      $region52: #{tpu_custom_call.1} parent=5 // pred_fallthru
        _
      %p1289 = scmp.le.s32.totalorder 2, %s17
      // Predicated region
      $region57: #{tpu_custom_call.1} parent=5 // pred_check
        %p1290 = pneg %p1289
      $region58: #{tpu_custom_call.1} parent=5 // pred_check_branch
        %1292 = sbr.rel (%p1290) target = $region60
      $region59: #{tpu_custom_call.1} parent=5 // pred_region
        %s1293 = ssub.s32 %s17, 2
        // Predicated region
        $region61: #{tpu_custom_call.1} parent=59 // pred_check
          %p1294 = pneg %p219
        $region62: #{tpu_custom_call.1} parent=59 // pred_check_branch
          %1296 = sbr.rel (%p1294) target = $region64
        $region63: #{tpu_custom_call.1} parent=59 // pred_region
          %s1297 = sand.u32 %s204, 1
          %s1298 = scalar_lea.sflag [#allocation3], %s1297
          %s1299 = sand.u32 %s204, 1
          %s1300 = smul.addr %s1299, 4
          %s1301 = scalar_lea.vmem [#allocation2], %s1300
          %1302 = dma.done %s1298, 64
        $region64: #{tpu_custom_call.1} parent=59 // pred_fallthru
          _
      $region60: #{tpu_custom_call.1} parent=5 // pred_fallthru
        _
    $region6: #{tpu_custom_call.1} parent=1 // loop_footer
      %s21 = sadd.s32 1, %s17
    $region7: #{tpu_custom_call.1} parent=1 // loop_footer_branch
      %16 = sbr.rel target = $region3
    $region8: #{tpu_custom_call.1} parent=1 // loop_exit
      _
    %1303 = vsyncpa [#allocation3], 1
    %s1304 = scalar_lea.sflag [#allocation3], 1
    %1305 = vsyncpa %s1304, 1

</llo_original>
